<compile_context>
chip_gen: v7x
topology: tpu7x:2x2x1
jax: 0.10.0
libtpu: 0.0.40
codegen_flags: <defaults>
</compile_context>

<pallas_src>
import itertools
import math

import numpy as np
import jax
import jax.numpy as jnp
from jax.experimental import pallas as pl
from jax.experimental.pallas import tpu as pltpu


# --------------------------------------------------------------------------- #
# Deterministic parameter / buffer construction (plain numpy glue)
# --------------------------------------------------------------------------- #
def _sinusoidal_pos_embed(ve_dim: int, feature_dim: int) -> np.ndarray:
    """Exactly replicates the `abs_pos_embed` buffer built in MaskEmbedder.__init__."""
    pe = np.zeros((ve_dim, feature_dim), dtype=np.float32)
    position = np.arange(ve_dim, dtype=np.float32)[:, None]
    div_term = np.exp(
        np.arange(0, feature_dim, 2, dtype=np.float32) * -(math.log(10000.0) / feature_dim)
    )
    pe[:, 0::2] = np.sin(position * div_term)
    pe[:, 1::2] = np.cos(position * div_term)
    return pe


def _adaptive_avg_pool1d_matrix(in_len: int, out_len: int) -> np.ndarray:
    """P such that x @ P == F.adaptive_avg_pool1d(x, out_len) (PyTorch bin rule).
    Only used (wrapper + numpy reference) when in_len % out_len != 0."""
    P = np.zeros((in_len, out_len), dtype=np.float32)
    for i in range(out_len):
        start = (i * in_len) // out_len
        end = -((-(i + 1) * in_len) // out_len)  # ceil((i+1)*L/out)
        P[start:end, i] = 1.0 / float(end - start)
    return P


def _compute_batch_ranges(num_masks: int):
    """Replicates MaskEmbedder._compute_batch_ranges for the chosen config
    (averaging=True -> every feature chunk has length 1, token has length 1)."""
    lengths = [1] + [2] * num_masks
    ends = list(itertools.accumulate(lengths))
    starts = [0] + ends[:-1]
    adjusted = [starts[0]]
    for i in range(1, len(starts)):
        tentative = starts[i] + 1
        if tentative - ends[i - 1] < 2:
            tentative = ends[i - 1] + 2
        adjusted.append(tentative)
    return list(zip(adjusted, ends))


# --------------------------------------------------------------------------- #
# Pallas kernel: one grid step per (batch tile, feature tile)
# --------------------------------------------------------------------------- #
def _mask_embedder_kernel(w_ref, x_ref, pe_ref, inv_ref, corr_ref, out_ref):
    # w_ref   : (Bt, R, V)  bf16  R = 1+2M; row0 = ones, odd rows = 0,
    #                             row 2+2m = downsampled mask m (0/1, exact in bf16)
    # x_ref   : (Bt, V, Ft) native dtype; cast to bf16 in-VMEM (free VPU filler)
    # pe_ref  : (V, Ft)     bf16  positional-embedding tile (batch-invariant)
    # inv_ref : (Bt, R, 1)  f32   row0 = 1/V, odd rows = 0, row 2+2m = 1/count_m
    # corr_ref: (R, Ft)     f32   row0 = mean(pe), odd rows = -bom_token, even = 0
    # out_ref : (Bt, R, Ft) model dtype, final interleaved layout
    #           [global_avg, tok, avg_0, tok, avg_1, ...]
    xp = x_ref[...].astype(jnp.bfloat16) + pe_ref[...][None]          # (Bt, V, Ft) bf16
    sums = jnp.einsum(
        "brv,bvf->brf", w_ref[...], xp,
        preferred_element_type=jnp.float32)                           # (Bt, R, Ft) f32
    out = sums * inv_ref[...] - corr_ref[...][None]                   # one fixup, one store
    out_ref[...] = out.astype(out_ref.dtype)


# --------------------------------------------------------------------------- #
# Wrapper
# --------------------------------------------------------------------------- #
def _pick_f_tile(F: int, target: int) -> int:
    """Largest power-of-two multiple of 128 (<= target) dividing F, else F."""
    if F <= target:
        return F
    cand = target
    while cand >= 128:
        if F % cand == 0:
            return cand
        cand //= 2
    return F


def mask_embedder_forward(image_features, masks, pe, bom_token, *,
                          block_b=4, block_f=1024, return_indices=True):
    """image_features: (B, V, F); masks: (B, M, H, W) 0/1; pe: (V, F); bom_token: (1, F).

    block_b / block_f tuning: with Ft <= 1024 the default block_b=4 fits v7x's
    64 MiB VMEM (double-buffered f32 x-block ~19 MiB at V=576, Ft=1024); v5e/v6e
    can raise block_f instead.  Under jit, call with return_indices=False (the
    ragged index metadata requires a host transfer).
    """
    B, V, F = image_features.shape
    _, M, H, W = masks.shape
    L = H * W
    R = 1 + 2 * M
    out_dtype = image_features.dtype

    # ---- downsample_mask_to_1d_counts: bool masks, exact int32 bin counts ----
    m_bool = masks.reshape(B, M, L) != 0                               # 1 byte/elem
    if L % V == 0:
        counts = jnp.sum(m_bool.reshape(B, M, V, L // V), axis=-1, dtype=jnp.int32)
        resized = counts >= 1            # integer count >= 0.5  <=>  count >= 1
    else:
        # Non-uniform PyTorch bins: pooled * (L/V) >= 0.5 (matches torch module).
        pool = jnp.asarray(_adaptive_avg_pool1d_matrix(L, V))
        counts_f = jnp.einsum("bml,lv->bmv", m_bool.astype(jnp.float32), pool) * (L / V)
        resized = counts_f >= 0.5                                      # (B, M, V) bool

    # ---- fold global row + BOM-token rows into the single matmul ----
    w = jnp.zeros((B, R, V), jnp.bfloat16)
    w = w.at[:, 0, :].set(1.0)                                         # global row
    w = w.at[:, 2::2, :].set(resized.astype(jnp.bfloat16))             # mask rows (0/1 exact)

    cnt = jnp.sum(resized, axis=-1).astype(jnp.float32)                # (B, M) exact ints
    inv = jnp.zeros((B, R), jnp.float32)
    inv = inv.at[:, 0].set(1.0 / float(V))
    inv = inv.at[:, 2::2].set(1.0 / cnt)                               # exact f32 divide
    inv = inv[:, :, None]                                              # (B, R, 1)

    pe_bf = pe.astype(jnp.bfloat16)                                    # tiny, batch-invariant
    corr = jnp.zeros((R, F), jnp.float32)
    corr = corr.at[0, :].set(jnp.mean(pe_bf.astype(jnp.float32), axis=0))
    corr = corr.at[1::2, :].set(-bom_token.reshape(F).astype(jnp.float32))

    # ---- tiling: Bt images x Ft features per grid step (both axes parallel) ----
    Bt = max(1, min(B, int(block_b)))
    Ft = _pick_f_tile(F, int(block_f))
    grid = (pl.cdiv(B, Bt), pl.cdiv(F, Ft))

    # VMEM budget from the actual block sizes (PE single-buffered), capped below
    # v7x's 64 MiB; v5e/v6e have ample headroom at these sizes.
    def _nbytes(shape, dt):
        return int(np.prod(shape)) * jnp.dtype(dt).itemsize

    raw = (2 * (_nbytes((Bt, V, Ft), image_features.dtype)
                + _nbytes((Bt, R, V), jnp.bfloat16)
                + _nbytes((Bt, R, 1), jnp.float32)
                + _nbytes((R, Ft), jnp.float32)
                + _nbytes((Bt, R, Ft), out_dtype))
           + _nbytes((V, Ft), jnp.bfloat16))
    vmem_limit = int(min(max(raw + max(raw // 4, 4 << 20), 8 << 20), 48 << 20))

    def _build(single_buffer_pe):
        if single_buffer_pe:
            pe_spec = pl.BlockSpec((V, Ft), lambda b, f: (0, f),
                                   pipeline_mode=pl.Buffered(1))
        else:
            pe_spec = pl.BlockSpec((V, Ft), lambda b, f: (0, f))
        return pl.pallas_call(
            _mask_embedder_kernel,
            grid=grid,
            in_specs=[
                pl.BlockSpec((Bt, R, V), lambda b, f: (b, 0, 0)),
                pl.BlockSpec((Bt, V, Ft), lambda b, f: (b, 0, f)),
                pe_spec,
                pl.BlockSpec((Bt, R, 1), lambda b, f: (b, 0, 0)),
                pl.BlockSpec((R, Ft), lambda b, f: (0, f)),
            ],
            out_specs=pl.BlockSpec((Bt, R, Ft), lambda b, f: (b, 0, f)),
            out_shape=jax.ShapeDtypeStruct((B, R, F), out_dtype),
            compiler_params=pltpu.CompilerParams(
                dimension_semantics=("parallel", "parallel"),
                vmem_limit_bytes=vmem_limit,
            ),
        )

    try:
        out_feat = _build(hasattr(pl, "Buffered"))(w, image_features, pe_bf, inv, corr)
    except Exception:
        # pipeline_mode=Buffered(1) unsupported -> default double buffering.
        out_feat = _build(False)(w, image_features, pe_bf, inv, corr)

    # TODO(synk): check_resised_image_masks removal/replacement of all-False
    # downsampled masks is data-dependent (changes output length); with static
    # Pallas shapes an all-False mask instead yields a NaN mean row (0 * inf),
    # which the host-side consumer must filter.

    # ---- host-side ragged metadata (pure-Python glue, mirrors the module API) ----
    batch_ranges = [_compute_batch_ranges(M) for _ in range(B)]
    batch_mask_flat_indices = None
    if return_indices:
        # Single device->host transfer AFTER the kernel dispatch so the transfer
        # and python loops overlap the (async) kernel execution.
        resized_host = np.asarray(jax.device_get(resized))
        batch_mask_flat_indices = []
        for b in range(B):
            idx_list = []
            for mi in range(M):
                idxs = np.nonzero(resized_host[b, mi])[0].astype(np.int64)
                if idxs.size > 0 and idxs.min() == 0:
                    pass
                else:
                    idxs = idxs - 1
                    if (idxs < 0).any():
                        raise ValueError("Index shift produced negative values.")
                idx_list.append(idxs)
            batch_mask_flat_indices.append(idx_list)

    return out_feat, batch_ranges, batch_mask_flat_indices


# --------------------------------------------------------------------------- #
# Pure numpy reference (mirrors the PyTorch semantics for the chosen config)
# --------------------------------------------------------------------------- #
def _reference_forward(image_features, masks, pe, bom_token):
    x = np.asarray(image_features, dtype=np.float32)
    mk = np.asarray(masks, dtype=np.float32)
    pe = np.asarray(pe, dtype=np.float32)
    tok = np.asarray(bom_token, dtype=np.float32)
    B, V, F = x.shape
    _, M, H, W = mk.shape
    L = H * W
    P = _adaptive_avg_pool1d_matrix(L, V)
    outs = []
    for b in range(B):
        rows = [x[b].mean(axis=0, keepdims=True)]
        for m in range(M):
            flat = mk[b, m].reshape(-1)
            pooled = flat @ P
            counts = pooled * (L / V)
            resized = counts >= 0.5
            sel = (x[b] + pe)[resized]
            rows.append(tok)
            rows.append(sel.mean(axis=0, keepdims=True))
        outs.append(np.concatenate(rows, axis=0))
    return np.stack(outs)


if __name__ == "__main__":
    # batch, masks/image, mask HxW, ve_dim (V), mm_hidden_size (F, lane-dense)
    B, M, H, W, V, F = 2, 3, 16, 16, 64, 128

    key = jax.random.PRNGKey(0)
    k_feat, k_mask, k_tok = jax.random.split(key, 3)
    image_features = jax.random.normal(k_feat, (B, V, F), dtype=jnp.float32)
    masks = jax.random.bernoulli(k_mask, 0.5, (B, M, H, W)).astype(jnp.int32)
    bom_token = (0.02 * jax.random.normal(k_tok, (1, F))).astype(jnp.float32)
    pe = jnp.asarray(_sinusoidal_pos_embed(V, F))

    out_feat, batch_ranges, batch_flat_idx = mask_embedder_forward(
        image_features, masks, pe, bom_token
    )
    out_feat = jax.block_until_ready(out_feat)

    ref = _reference_forward(image_features, masks, pe, bom_token)
    # bf16 feature/PE path inside the kernel -> compare to the f32 reference with
    # a bf16-appropriate tolerance (counts / divides / token rows are exact).
    np.testing.assert_allclose(np.asarray(out_feat), ref, rtol=2e-2, atol=2e-2)
    assert out_feat.shape == (B, 1 + 2 * M, F)
    assert out_feat.dtype == image_features.dtype
    assert len(batch_ranges) == B and len(batch_flat_idx) == B

    print("KERNEL_OK")
</pallas_src>

<mosaic_0001>
module attributes {stable_mosaic.version = 11 : i64} {
  func.func @_mask_embedder_kernel(%arg0: i32, %arg1: i32, %arg2: memref<2x7x64xbf16, #tpu.memory_space<vmem>>, %arg3: memref<2x64x128xf32, #tpu.memory_space<vmem>>, %arg4: memref<64x128xbf16, #tpu.memory_space<vmem>>, %arg5: memref<2x7x1xf32, #tpu.memory_space<vmem>>, %arg6: memref<7x128xf32, #tpu.memory_space<vmem>>, %arg7: memref<2x7x128xf32, #tpu.memory_space<vmem>>) attributes {dimension_semantics = [#tpu.dimension_semantics<parallel>, #tpu.dimension_semantics<parallel>], iteration_bounds = array<i64: 1, 1>, scalar_prefetch = 0 : i64, scratch_operands = 0 : i64, tpu.core_type = #tpu.core_type<tc>, window_params = [{transform_indices = @transform_0, window_bounds = array<i64: 2, 7, 64>}, {transform_indices = @transform_1, window_bounds = array<i64: 2, 64, 128>}, {pipeline_mode = #tpu.pipeline_mode<synchronous>, transform_indices = @transform_2, window_bounds = array<i64: 64, 128>}, {transform_indices = @transform_3, window_bounds = array<i64: 2, 7, 1>}, {transform_indices = @transform_4, window_bounds = array<i64: 7, 128>}, {transform_indices = @transform_5, window_bounds = array<i64: 2, 7, 128>}]} {
    %c0 = arith.constant 0 : index
    %c0_0 = arith.constant 0 : index
    %c0_1 = arith.constant 0 : index
    %0 = vector.load %arg3[%c0, %c0_0, %c0_1] : memref<2x64x128xf32, #tpu.memory_space<vmem>>, vector<2x64x128xf32>
    %1 = arith.truncf %0 : vector<2x64x128xf32> to vector<2x64x128xbf16>
    %c0_2 = arith.constant 0 : index
    %c0_3 = arith.constant 0 : index
    %2 = vector.load %arg4[%c0_2, %c0_3] : memref<64x128xbf16, #tpu.memory_space<vmem>>, vector<64x128xbf16>
    %3 = vector.shape_cast %2 : vector<64x128xbf16> to vector<1x64x128xbf16>
    %4 = vector.broadcast %3 : vector<1x64x128xbf16> to vector<2x64x128xbf16>
    %5 = arith.addf %1, %4 : vector<2x64x128xbf16>
    %c0_4 = arith.constant 0 : index
    %c0_5 = arith.constant 0 : index
    %c0_6 = arith.constant 0 : index
    %6 = vector.load %arg2[%c0_4, %c0_5, %c0_6] : memref<2x7x64xbf16, #tpu.memory_space<vmem>>, vector<2x7x64xbf16>
    "tpu.trace_start"() <{level = 10 : i32, message = "brv,bvf->brf"}> : () -> ()
    %cst = arith.constant dense<0.000000e+00> : vector<2x7x128xf32>
    %7 = tpu.matmul %6, %5, %cst {dimension_numbers = #tpu.dot_dimension_numbers<[2], [1], [1], [2], [0, 0, 0, 1, 1, 2], [0], [0]>} : vector<2x7x64xbf16>, vector<2x64x128xbf16>, vector<2x7x128xf32> -> vector<2x7x128xf32>
    "tpu.trace_stop"() : () -> ()
    %c0_7 = arith.constant 0 : index
    %c0_8 = arith.constant 0 : index
    %c0_9 = arith.constant 0 : index
    %8 = vector.load %arg5[%c0_7, %c0_8, %c0_9] : memref<2x7x1xf32, #tpu.memory_space<vmem>>, vector<2x7x1xf32>
    %9 = vector.broadcast %8 : vector<2x7x1xf32> to vector<2x7x128xf32>
    %10 = arith.mulf %7, %9 : vector<2x7x128xf32>
    %c0_10 = arith.constant 0 : index
    %c0_11 = arith.constant 0 : index
    %11 = vector.load %arg6[%c0_10, %c0_11] : memref<7x128xf32, #tpu.memory_space<vmem>>, vector<7x128xf32>
    %12 = vector.shape_cast %11 : vector<7x128xf32> to vector<1x7x128xf32>
    %13 = vector.broadcast %12 : vector<1x7x128xf32> to vector<2x7x128xf32>
    %14 = arith.subf %10, %13 : vector<2x7x128xf32>
    %c0_12 = arith.constant 0 : index
    %c0_13 = arith.constant 0 : index
    %c0_14 = arith.constant 0 : index
    %15 = vector.load %arg7[%c0_12, %c0_13, %c0_14] : memref<2x7x128xf32, #tpu.memory_space<vmem>>, vector<2x7x128xf32>
    tpu.vector_store %arg7[%c0_12, %c0_13, %c0_14], %14 {strides = array<i32>} : memref<2x7x128xf32, #tpu.memory_space<vmem>>, vector<2x7x128xf32>,
    return
  }
  func.func @transform_0(%arg0: i32, %arg1: i32) -> (i32, i32, i32) {
    %c0_i32 = arith.constant 0 : i32
    %c0_i32_0 = arith.constant 0 : i32
    %c0_i32_1 = arith.constant 0 : i32
    return %arg0, %c0_i32, %c0_i32_0 : i32, i32, i32
  }
  func.func @transform_1(%arg0: i32, %arg1: i32) -> (i32, i32, i32) {
    %c0_i32 = arith.constant 0 : i32
    %c0_i32_0 = arith.constant 0 : i32
    return %arg0, %c0_i32, %arg1 : i32, i32, i32
  }
  func.func @transform_2(%arg0: i32, %arg1: i32) -> (i32, i32) {
    %c0_i32 = arith.constant 0 : i32
    %c0_i32_0 = arith.constant 0 : i32
    return %c0_i32, %arg1 : i32, i32
  }
  func.func @transform_3(%arg0: i32, %arg1: i32) -> (i32, i32, i32) {
    %c0_i32 = arith.constant 0 : i32
    %c0_i32_0 = arith.constant 0 : i32
    %c0_i32_1 = arith.constant 0 : i32
    return %arg0, %c0_i32, %c0_i32_0 : i32, i32, i32
  }
  func.func @transform_4(%arg0: i32, %arg1: i32) -> (i32, i32) {
    %c0_i32 = arith.constant 0 : i32
    %c0_i32_0 = arith.constant 0 : i32
    return %c0_i32, %arg1 : i32, i32
  }
  func.func @transform_5(%arg0: i32, %arg1: i32) -> (i32, i32, i32) {
    %c0_i32 = arith.constant 0 : i32
    %c0_i32_0 = arith.constant 0 : i32
    return %arg0, %c0_i32, %arg1 : i32, i32, i32
  }
}

module attributes {stable_mosaic.version = 11 : i64} {
  func.func @_mask_embedder_kernel(%arg0: i32, %arg1: i32, %arg2: memref<2x7x64xbf16, #tpu.memory_space<vmem>>, %arg3: memref<2x64x128xf32, #tpu.memory_space<vmem>>, %arg4: memref<64x128xbf16, #tpu.memory_space<vmem>>, %arg5: memref<2x7x1xf32, #tpu.memory_space<vmem>>, %arg6: memref<7x128xf32, #tpu.memory_space<vmem>>, %arg7: memref<2x7x128xf32, #tpu.memory_space<vmem>>) attributes {dimension_semantics = [#tpu.dimension_semantics<parallel>, #tpu.dimension_semantics<parallel>], iteration_bounds = array<i64: 1, 1>, scalar_prefetch = 0 : i64, scratch_operands = 0 : i64, tpu.core_type = #tpu.core_type<tc>, window_params = [{transform_indices = @transform_0, window_bounds = array<i64: 2, 7, 64>}, {transform_indices = @transform_1, window_bounds = array<i64: 2, 64, 128>}, {transform_indices = @transform_2, window_bounds = array<i64: 64, 128>}, {transform_indices = @transform_3, window_bounds = array<i64: 2, 7, 1>}, {transform_indices = @transform_4, window_bounds = array<i64: 7, 128>}, {transform_indices = @transform_5, window_bounds = array<i64: 2, 7, 128>}]} {
    %c0 = arith.constant 0 : index
    %c0_0 = arith.constant 0 : index
    %c0_1 = arith.constant 0 : index
    %0 = vector.load %arg3[%c0, %c0_0, %c0_1] : memref<2x64x128xf32, #tpu.memory_space<vmem>>, vector<2x64x128xf32>
    %1 = arith.truncf %0 : vector<2x64x128xf32> to vector<2x64x128xbf16>
    %c0_2 = arith.constant 0 : index
    %c0_3 = arith.constant 0 : index
    %2 = vector.load %arg4[%c0_2, %c0_3] : memref<64x128xbf16, #tpu.memory_space<vmem>>, vector<64x128xbf16>
    %3 = vector.shape_cast %2 : vector<64x128xbf16> to vector<1x64x128xbf16>
    %4 = vector.broadcast %3 : vector<1x64x128xbf16> to vector<2x64x128xbf16>
    %5 = arith.addf %1, %4 : vector<2x64x128xbf16>
    %c0_4 = arith.constant 0 : index
    %c0_5 = arith.constant 0 : index
    %c0_6 = arith.constant 0 : index
    %6 = vector.load %arg2[%c0_4, %c0_5, %c0_6] : memref<2x7x64xbf16, #tpu.memory_space<vmem>>, vector<2x7x64xbf16>
    "tpu.trace_start"() <{level = 10 : i32, message = "brv,bvf->brf"}> : () -> ()
    %cst = arith.constant dense<0.000000e+00> : vector<2x7x128xf32>
    %7 = tpu.matmul %6, %5, %cst {dimension_numbers = #tpu.dot_dimension_numbers<[2], [1], [1], [2], [0, 0, 0, 1, 1, 2], [0], [0]>} : vector<2x7x64xbf16>, vector<2x64x128xbf16>, vector<2x7x128xf32> -> vector<2x7x128xf32>
    "tpu.trace_stop"() : () -> ()
    %c0_7 = arith.constant 0 : index
    %c0_8 = arith.constant 0 : index
    %c0_9 = arith.constant 0 : index
    %8 = vector.load %arg5[%c0_7, %c0_8, %c0_9] : memref<2x7x1xf32, #tpu.memory_space<vmem>>, vector<2x7x1xf32>
    %9 = vector.broadcast %8 : vector<2x7x1xf32> to vector<2x7x128xf32>
    %10 = arith.mulf %7, %9 : vector<2x7x128xf32>
    %c0_10 = arith.constant 0 : index
    %c0_11 = arith.constant 0 : index
    %11 = vector.load %arg6[%c0_10, %c0_11] : memref<7x128xf32, #tpu.memory_space<vmem>>, vector<7x128xf32>
    %12 = vector.shape_cast %11 : vector<7x128xf32> to vector<1x7x128xf32>
    %13 = vector.broadcast %12 : vector<1x7x128xf32> to vector<2x7x128xf32>
    %14 = arith.subf %10, %13 : vector<2x7x128xf32>
    %c0_12 = arith.constant 0 : index
    %c0_13 = arith.constant 0 : index
    %c0_14 = arith.constant 0 : index
    %15 = vector.load %arg7[%c0_12, %c0_13, %c0_14] : memref<2x7x128xf32, #tpu.memory_space<vmem>>, vector<2x7x128xf32>
    tpu.vector_store %arg7[%c0_12, %c0_13, %c0_14], %14 {strides = array<i32>} : memref<2x7x128xf32, #tpu.memory_space<vmem>>, vector<2x7x128xf32>,
    return
  }
  func.func @transform_0(%arg0: i32, %arg1: i32) -> (i32, i32, i32) {
    %c0_i32 = arith.constant 0 : i32
    %c0_i32_0 = arith.constant 0 : i32
    %c0_i32_1 = arith.constant 0 : i32
    return %arg0, %c0_i32, %c0_i32_0 : i32, i32, i32
  }
  func.func @transform_1(%arg0: i32, %arg1: i32) -> (i32, i32, i32) {
    %c0_i32 = arith.constant 0 : i32
    %c0_i32_0 = arith.constant 0 : i32
    return %arg0, %c0_i32, %arg1 : i32, i32, i32
  }
  func.func @transform_2(%arg0: i32, %arg1: i32) -> (i32, i32) {
    %c0_i32 = arith.constant 0 : i32
    %c0_i32_0 = arith.constant 0 : i32
    return %c0_i32, %arg1 : i32, i32
  }
  func.func @transform_3(%arg0: i32, %arg1: i32) -> (i32, i32, i32) {
    %c0_i32 = arith.constant 0 : i32
    %c0_i32_0 = arith.constant 0 : i32
    %c0_i32_1 = arith.constant 0 : i32
    return %arg0, %c0_i32, %c0_i32_0 : i32, i32, i32
  }
  func.func @transform_4(%arg0: i32, %arg1: i32) -> (i32, i32) {
    %c0_i32 = arith.constant 0 : i32
    %c0_i32_0 = arith.constant 0 : i32
    return %c0_i32, %arg1 : i32, i32
  }
  func.func @transform_5(%arg0: i32, %arg1: i32) -> (i32, i32, i32) {
    %c0_i32 = arith.constant 0 : i32
    %c0_i32_0 = arith.constant 0 : i32
    return %arg0, %c0_i32, %arg1 : i32, i32, i32
  }
}

</mosaic_0001>

<llo_original>
// kernel: tpu_custom_call.1
$region0: #{tpu_custom_call.1}
  #allocation0 [shape = 'u32[]', space=smem, size = 0x4, offset = 0x4, fixed_abs, tag = 'smem constant byte address 0x4 - core index']
  #allocation1 [shape = 'u32[144,128]{1,0:T(1,128)}', space=vmem, size = 0x12000, scoped, tag = 'internal scratch']
  %s0 = inlined_call_operand.vmem [shape: bf16[2,7,64], index: 0, kind: input, shape index: {}]
  %s1 = inlined_call_operand.hbm [shape: f32[2,64,128], index: 1, kind: input, shape index: {}]
  %s2 = inlined_call_operand.vmem [shape: bf16[64,128], index: 2, kind: input, shape index: {}]
  %s3 = inlined_call_operand.vmem [shape: f32[2,7,1], index: 3, kind: input, shape index: {}]
  %s4 = inlined_call_operand.vmem [shape: f32[7,128], index: 4, kind: input, shape index: {}]
  %s5 = inlined_call_operand.vmem [shape: f32[2,7,128], index: 5, kind: output, shape index: {}]
  %s6 = sld [smem:[#allocation0]]
  $region34: #{tpu_custom_call.1} parent=0
    _
  %s8 = ssub.s32 1, %s6
  %s9 = scalar_select 0, %s8, %s6
  $region1: #{tpu_custom_call.1} parent=0
    #allocation2 [shape = 'u8[65536]{0}', space=vmem, size = 0x10000, scoped, tag = 'input window, operand 1, single buffered']
    #allocation3 [shape = 's32[1]{0}', space=sflag, size = 0x4, scoped, tag = 'scoped memory for tpu_custom_call.1']
    %10 = vsyncpa [#allocation3], 0
    // Predicated region
    $region2: #{tpu_custom_call.1} parent=1 // pred_check
      _
    $region3: #{tpu_custom_call.1} parent=1 // pred_check_branch
      %12 = sbr.rel (0) target = $region5
    $region4: #{tpu_custom_call.1} parent=1 // pred_region
      _
    $region5: #{tpu_custom_call.1} parent=1 // pred_fallthru
      _
    // Predicated region
    $region6: #{tpu_custom_call.1} parent=1 // pred_check
      _
    $region7: #{tpu_custom_call.1} parent=1 // pred_check_branch
      %14 = sbr.rel (0) target = $region9
    $region8: #{tpu_custom_call.1} parent=1 // pred_region
      %s16 = ssub.s32 2048, 2048
      %17 = vsyncadd [#allocation3], %s16
      %s18 = sshll.u32 [#allocation2], 4
      %s19 = int_to_ptr.vmem [resolvable:$true] %s18
      %24 = dma.hbm_to_vmem [thread:$0]  %s1, 2048, %s19, [#allocation3], 128, 128, 8
    $region9: #{tpu_custom_call.1} parent=1 // pred_fallthru
      _
    // Predicated region
    $region10: #{tpu_custom_call.1} parent=1 // pred_check
      _
    $region11: #{tpu_custom_call.1} parent=1 // pred_check_branch
      %26 = sbr.rel (0) target = $region13
    $region12: #{tpu_custom_call.1} parent=1 // pred_region
      _
    $region13: #{tpu_custom_call.1} parent=1 // pred_fallthru
      _
    // Predicated region
    $region14: #{tpu_custom_call.1} parent=1 // pred_check
      _
    $region15: #{tpu_custom_call.1} parent=1 // pred_check_branch
      %28 = sbr.rel (0) target = $region17
    $region16: #{tpu_custom_call.1} parent=1 // pred_region
      _
    $region17: #{tpu_custom_call.1} parent=1 // pred_fallthru
      _
    // Predicated region
    $region18: #{tpu_custom_call.1} parent=1 // pred_check
      _
    $region19: #{tpu_custom_call.1} parent=1 // pred_check_branch
      %30 = sbr.rel (0) target = $region21
    $region20: #{tpu_custom_call.1} parent=1 // pred_region
      _
    $region21: #{tpu_custom_call.1} parent=1 // pred_fallthru
      _
    // Predicated region
    $region22: #{tpu_custom_call.1} parent=1 // pred_check
      _
    $region23: #{tpu_custom_call.1} parent=1 // pred_check_branch
      %32 = sbr.rel (0) target = $region25
    $region24: #{tpu_custom_call.1} parent=1 // pred_region
      %33 = dma.done [#allocation3], 2048
    $region25: #{tpu_custom_call.1} parent=1 // pred_fallthru
      _
    %v35 = vld [vmem:[#allocation2] sm:$0xff]
    %v36 = vld [vmem:[#allocation2 + $0x8] sm:$0xff]
    %v37 = vld [vmem:[#allocation2 + $0x10] sm:$0xff]
    %v38 = vld [vmem:[#allocation2 + $0x18] sm:$0xff]
    %v39 = vld [vmem:[#allocation2 + $0x20] sm:$0xff]
    %v40 = vld [vmem:[#allocation2 + $0x28] sm:$0xff]
    %v41 = vld [vmem:[#allocation2 + $0x30] sm:$0xff]
    %v42 = vld [vmem:[#allocation2 + $0x38] sm:$0xff]
    %v43 = vld [vmem:[#allocation2 + $0x40] sm:$0xff]
    %v44 = vld [vmem:[#allocation2 + $0x48] sm:$0xff]
    %v45 = vld [vmem:[#allocation2 + $0x50] sm:$0xff]
    %v46 = vld [vmem:[#allocation2 + $0x58] sm:$0xff]
    %v47 = vld [vmem:[#allocation2 + $0x60] sm:$0xff]
    %v48 = vld [vmem:[#allocation2 + $0x68] sm:$0xff]
    %v49 = vld [vmem:[#allocation2 + $0x70] sm:$0xff]
    %v50 = vld [vmem:[#allocation2 + $0x78] sm:$0xff]
    %v51 = vpack.c.bf16 %v36, %v35
    %v52 = vpack.c.bf16 %v38, %v37
    %v53 = vpack.c.bf16 %v40, %v39
    %v54 = vpack.c.bf16 %v42, %v41
    %v55 = vpack.c.bf16 %v44, %v43
    %v56 = vpack.c.bf16 %v46, %v45
    %v57 = vpack.c.bf16 %v48, %v47
    %v58 = vpack.c.bf16 %v50, %v49
    %v59 = vld [vmem:[%s2] sm:$0xf]
    %v60 = vld [vmem:[%s2 + $0x4] sm:$0xf]
    %v61 = vld [vmem:[%s2 + $0x8] sm:$0xf]
    %v62 = vld [vmem:[%s2 + $0xc] sm:$0xf]
    %v63 = vld [vmem:[%s2 + $0x10] sm:$0xf]
    %v64 = vld [vmem:[%s2 + $0x14] sm:$0xf]
    %v65 = vld [vmem:[%s2 + $0x18] sm:$0xf]
    %v66 = vld [vmem:[%s2 + $0x1c] sm:$0xf]
    %v75 = vunpack.c.l.b16 %v59
    %v76 = vunpack.c.l.b16 %v60
    %v77 = vunpack.c.l.b16 %v61
    %v78 = vunpack.c.l.b16 %v62
    %v79 = vunpack.c.l.b16 %v63
    %v80 = vunpack.c.l.b16 %v64
    %v81 = vunpack.c.l.b16 %v65
    %v82 = vunpack.c.l.b16 %v66
    %v83 = vpack.c.b16 %v76, %v75
    %v84 = vpack.c.b16 %v78, %v77
    %v85 = vpack.c.b16 %v80, %v79
    %v86 = vpack.c.b16 %v82, %v81
    %v91 = vadd.bf16 %v51, %v83
    %v92 = vadd.bf16 %v52, %v84
    %v93 = vadd.bf16 %v53, %v85
    %v94 = vadd.bf16 %v54, %v86
    %v95 = vadd.bf16 %v55, %v83
    %v96 = vadd.bf16 %v56, %v84
    %v97 = vadd.bf16 %v57, %v85
    %v98 = vadd.bf16 %v58, %v86
    %v99 = vld [vmem:[%s0] sm:$0xf]
    %v100 = vld [vmem:[%s0 + $0x4] sm:$0xf]
    %vm101 = vcmask 523264
    %v103 = vsel %vm101, %v99, 0
    %105 = vmatprep.subr.bf16.mxu0 0
    %106 = vmatpush1.bf16.msra.mxu0 %v91
    %107 = vmatprep.subr.bf16.mxu0 0
    %108 = vmatpush1.bf16.msra.mxu0 %v92
    %109 = vmatprep.subr.bf16.mxu0 0
    %110 = vmatpush1.bf16.msra.mxu0 %v93
    %111 = vmatprep.subr.bf16.mxu0 0
    %112 = vmatpush1.bf16.msra.mxu0 %v94
    %113 = vmatprep.subr.bf16.mxu0 0
    %114 = vmatpush1.bf16.msra.mxu0 0
    %115 = vmatprep.subr.bf16.mxu0 0
    %116 = vmatpush1.bf16.msra.mxu0 0
    %117 = vmatprep.subr.bf16.mxu0 0
    %118 = vmatpush1.bf16.msra.mxu0 0
    %119 = vmatprep.subr.bf16.mxu0 0
    %120 = vmatpush1.bf16.msra.mxu0 0
    %121 = vmatprep.subr.bf16.mxu0 0
    %122 = vmatpush1.bf16.msra.mxu0 0
    %123 = vmatprep.subr.bf16.mxu0 0
    %124 = vmatpush1.bf16.msra.mxu0 0
    %125 = vmatprep.subr.bf16.mxu0 0
    %126 = vmatpush1.bf16.msra.mxu0 0
    %127 = vmatprep.subr.bf16.mxu0 0
    %128 = vmatpush1.bf16.msra.mxu0 0
    %129 = vmatprep.subr.bf16.mxu0 0
    %130 = vmatpush1.bf16.msra.mxu0 0
    %131 = vmatprep.subr.bf16.mxu0 0
    %132 = vmatpush1.bf16.msra.mxu0 0
    %133 = vmatprep.subr.bf16.mxu0 0
    %134 = vmatpush1.bf16.msra.mxu0 0
    %135 = vmatprep.subr.bf16.mxu0 0
    %136 = vmatpush1.bf16.msra.mxu0 0
    %137 = vmatprep.mubr.bf16.mxu0 0
    %138 = vmatmul.mubr.bf16.gmra.mrb[0].mxu0 %v103
    %v139 = vpop.f32.mrb[0].mxu0
    %v140 = vadd.f32 0.0, %v139
    %v141 = vpop.f32.mrb[0].mxu0
    %v142 = vpop.f32.mrb[0].mxu0
    %v143 = vpop.f32.mrb[0].mxu0
    %144 = vdwg.mxu0
    %v146 = vsel %vm101, %v100, 0
    %148 = vmatprep.subr.bf16.mxu0 0
    %149 = vmatpush1.bf16.msra.mxu0 %v95
    %150 = vmatprep.subr.bf16.mxu0 0
    %151 = vmatpush1.bf16.msra.mxu0 %v96
    %152 = vmatprep.subr.bf16.mxu0 0
    %153 = vmatpush1.bf16.msra.mxu0 %v97
    %154 = vmatprep.subr.bf16.mxu0 0
    %155 = vmatpush1.bf16.msra.mxu0 %v98
    %156 = vmatprep.subr.bf16.mxu0 0
    %157 = vmatpush1.bf16.msra.mxu0 0
    %158 = vmatprep.subr.bf16.mxu0 0
    %159 = vmatpush1.bf16.msra.mxu0 0
    %160 = vmatprep.subr.bf16.mxu0 0
    %161 = vmatpush1.bf16.msra.mxu0 0
    %162 = vmatprep.subr.bf16.mxu0 0
    %163 = vmatpush1.bf16.msra.mxu0 0
    %164 = vmatprep.subr.bf16.mxu0 0
    %165 = vmatpush1.bf16.msra.mxu0 0
    %166 = vmatprep.subr.bf16.mxu0 0
    %167 = vmatpush1.bf16.msra.mxu0 0
    %168 = vmatprep.subr.bf16.mxu0 0
    %169 = vmatpush1.bf16.msra.mxu0 0
    %170 = vmatprep.subr.bf16.mxu0 0
    %171 = vmatpush1.bf16.msra.mxu0 0
    %172 = vmatprep.subr.bf16.mxu0 0
    %173 = vmatpush1.bf16.msra.mxu0 0
    %174 = vmatprep.subr.bf16.mxu0 0
    %175 = vmatpush1.bf16.msra.mxu0 0
    %176 = vmatprep.subr.bf16.mxu0 0
    %177 = vmatpush1.bf16.msra.mxu0 0
    %178 = vmatprep.subr.bf16.mxu0 0
    %179 = vmatpush1.bf16.msra.mxu0 0
    %180 = vmatprep.mubr.bf16.mxu0 0
    %181 = vmatmul.mubr.bf16.gmra.mrb[0].mxu0 %v146
    %v182 = vpop.f32.mrb[0].mxu0
    %v183 = vadd.f32 0.0, %v182
    %v184 = vpop.f32.mrb[0].mxu0
    %v185 = vpop.f32.mrb[0].mxu0
    %v186 = vpop.f32.mrb[0].mxu0
    %187 = vdwg.mxu0
    %v188 = vld [vmem:[%s3] sm:$0x7f]
    %v189 = vld [vmem:[%s3 + $0x8] sm:$0x7f]
    %191 = vset.pattern.permute.xlu0 0
    %192 = vperm.xlu0 %191, %v188
    %v193 = vpop.permute.xlu0 %192
    %196 = vset.pattern.permute.xlu0 0
    %197 = vperm.xlu0 %196, %v189
    %v198 = vpop.permute.xlu0 %197
    %v200 = vmul.f32 %v140, %v193
    %v201 = vmul.f32 %v183, %v198
    %v202 = vld [vmem:[%s4] sm:$0x7f]
    %v203 = vsub.f32 %v200, %v202
    %v204 = vsub.f32 %v201, %v202
    %205 = vst [vmem:[%s5] sm:$0x7f] %v203
    %206 = vst [vmem:[%s5 + $0x8] sm:$0x7f] %v204
    // Predicated region
    $region26: #{tpu_custom_call.1} parent=1 // pred_check
      _
    $region27: #{tpu_custom_call.1} parent=1 // pred_check_branch
      %208 = sbr.rel (0) target = $region29
    $region28: #{tpu_custom_call.1} parent=1 // pred_region
      _
    $region29: #{tpu_custom_call.1} parent=1 // pred_fallthru
      _
    // Predicated region
    $region30: #{tpu_custom_call.1} parent=1 // pred_check
      _
    $region31: #{tpu_custom_call.1} parent=1 // pred_check_branch
      %210 = sbr.rel (0) target = $region33
    $region32: #{tpu_custom_call.1} parent=1 // pred_region
      _
    $region33: #{tpu_custom_call.1} parent=1 // pred_fallthru
      _
    %211 = vsyncpa [#allocation3], 1

// kernel: tpu_custom_call.1
$region0: #{tpu_custom_call.1}
  #allocation0 [shape = 'u32[]', space=smem, size = 0x4, offset = 0x4, fixed_abs, tag = 'smem constant byte address 0x4 - core index']
  #allocation1 [shape = 'u32[144,128]{1,0:T(1,128)}', space=vmem, size = 0x12000, scoped, tag = 'internal scratch']
  %s0 = inlined_call_operand.vmem [shape: bf16[2,7,64], index: 0, kind: input, shape index: {}]
  %s1 = inlined_call_operand.hbm [shape: f32[2,64,128], index: 1, kind: input, shape index: {}]
  %s2 = inlined_call_operand.vmem [shape: bf16[64,128], index: 2, kind: input, shape index: {}]
  %s3 = inlined_call_operand.vmem [shape: f32[2,7,1], index: 3, kind: input, shape index: {}]
  %s4 = inlined_call_operand.vmem [shape: f32[7,128], index: 4, kind: input, shape index: {}]
  %s5 = inlined_call_operand.vmem [shape: f32[2,7,128], index: 5, kind: output, shape index: {}]
  %s6 = sld [smem:[#allocation0]]
  $region34: #{tpu_custom_call.1} parent=0
    _
  %s8 = ssub.s32 1, %s6
  %s9 = scalar_select 0, %s8, %s6
  $region1: #{tpu_custom_call.1} parent=0
    #allocation2 [shape = 'u8[65536]{0}', space=vmem, size = 0x10000, scoped, tag = 'input window, operand 1, single buffered']
    #allocation3 [shape = 's32[1]{0}', space=sflag, size = 0x4, scoped, tag = 'scoped memory for tpu_custom_call.1']
    %10 = vsyncpa [#allocation3], 0
    // Predicated region
    $region2: #{tpu_custom_call.1} parent=1 // pred_check
      _
    $region3: #{tpu_custom_call.1} parent=1 // pred_check_branch
      %12 = sbr.rel (0) target = $region5
    $region4: #{tpu_custom_call.1} parent=1 // pred_region
      _
    $region5: #{tpu_custom_call.1} parent=1 // pred_fallthru
      _
    // Predicated region
    $region6: #{tpu_custom_call.1} parent=1 // pred_check
      _
    $region7: #{tpu_custom_call.1} parent=1 // pred_check_branch
      %14 = sbr.rel (0) target = $region9
    $region8: #{tpu_custom_call.1} parent=1 // pred_region
      %s16 = ssub.s32 2048, 2048
      %17 = vsyncadd [#allocation3], %s16
      %s18 = sshll.u32 [#allocation2], 4
      %s19 = int_to_ptr.vmem [resolvable:$true] %s18
      %24 = dma.hbm_to_vmem [thread:$0]  %s1, 2048, %s19, [#allocation3], 128, 128, 8
    $region9: #{tpu_custom_call.1} parent=1 // pred_fallthru
      _
    // Predicated region
    $region10: #{tpu_custom_call.1} parent=1 // pred_check
      _
    $region11: #{tpu_custom_call.1} parent=1 // pred_check_branch
      %26 = sbr.rel (0) target = $region13
    $region12: #{tpu_custom_call.1} parent=1 // pred_region
      _
    $region13: #{tpu_custom_call.1} parent=1 // pred_fallthru
      _
    // Predicated region
    $region14: #{tpu_custom_call.1} parent=1 // pred_check
      _
    $region15: #{tpu_custom_call.1} parent=1 // pred_check_branch
      %28 = sbr.rel (0) target = $region17
    $region16: #{tpu_custom_call.1} parent=1 // pred_region
      _
    $region17: #{tpu_custom_call.1} parent=1 // pred_fallthru
      _
    // Predicated region
    $region18: #{tpu_custom_call.1} parent=1 // pred_check
      _
    $region19: #{tpu_custom_call.1} parent=1 // pred_check_branch
      %30 = sbr.rel (0) target = $region21
    $region20: #{tpu_custom_call.1} parent=1 // pred_region
      _
    $region21: #{tpu_custom_call.1} parent=1 // pred_fallthru
      _
    // Predicated region
    $region22: #{tpu_custom_call.1} parent=1 // pred_check
      _
    $region23: #{tpu_custom_call.1} parent=1 // pred_check_branch
      %32 = sbr.rel (0) target = $region25
    $region24: #{tpu_custom_call.1} parent=1 // pred_region
      %33 = dma.done [#allocation3], 2048
    $region25: #{tpu_custom_call.1} parent=1 // pred_fallthru
      _
    %v35 = vld [vmem:[#allocation2] sm:$0xff]
    %v36 = vld [vmem:[#allocation2 + $0x8] sm:$0xff]
    %v37 = vld [vmem:[#allocation2 + $0x10] sm:$0xff]
    %v38 = vld [vmem:[#allocation2 + $0x18] sm:$0xff]
    %v39 = vld [vmem:[#allocation2 + $0x20] sm:$0xff]
    %v40 = vld [vmem:[#allocation2 + $0x28] sm:$0xff]
    %v41 = vld [vmem:[#allocation2 + $0x30] sm:$0xff]
    %v42 = vld [vmem:[#allocation2 + $0x38] sm:$0xff]
    %v43 = vld [vmem:[#allocation2 + $0x40] sm:$0xff]
    %v44 = vld [vmem:[#allocation2 + $0x48] sm:$0xff]
    %v45 = vld [vmem:[#allocation2 + $0x50] sm:$0xff]
    %v46 = vld [vmem:[#allocation2 + $0x58] sm:$0xff]
    %v47 = vld [vmem:[#allocation2 + $0x60] sm:$0xff]
    %v48 = vld [vmem:[#allocation2 + $0x68] sm:$0xff]
    %v49 = vld [vmem:[#allocation2 + $0x70] sm:$0xff]
    %v50 = vld [vmem:[#allocation2 + $0x78] sm:$0xff]
    %v51 = vpack.c.bf16 %v36, %v35
    %v52 = vpack.c.bf16 %v38, %v37
    %v53 = vpack.c.bf16 %v40, %v39
    %v54 = vpack.c.bf16 %v42, %v41
    %v55 = vpack.c.bf16 %v44, %v43
    %v56 = vpack.c.bf16 %v46, %v45
    %v57 = vpack.c.bf16 %v48, %v47
    %v58 = vpack.c.bf16 %v50, %v49
    %v59 = vld [vmem:[%s2] sm:$0xf]
    %v60 = vld [vmem:[%s2 + $0x4] sm:$0xf]
    %v61 = vld [vmem:[%s2 + $0x8] sm:$0xf]
    %v62 = vld [vmem:[%s2 + $0xc] sm:$0xf]
    %v63 = vld [vmem:[%s2 + $0x10] sm:$0xf]
    %v64 = vld [vmem:[%s2 + $0x14] sm:$0xf]
    %v65 = vld [vmem:[%s2 + $0x18] sm:$0xf]
    %v66 = vld [vmem:[%s2 + $0x1c] sm:$0xf]
    %v75 = vunpack.c.l.b16 %v59
    %v76 = vunpack.c.l.b16 %v60
    %v77 = vunpack.c.l.b16 %v61
    %v78 = vunpack.c.l.b16 %v62
    %v79 = vunpack.c.l.b16 %v63
    %v80 = vunpack.c.l.b16 %v64
    %v81 = vunpack.c.l.b16 %v65
    %v82 = vunpack.c.l.b16 %v66
    %v83 = vpack.c.b16 %v76, %v75
    %v84 = vpack.c.b16 %v78, %v77
    %v85 = vpack.c.b16 %v80, %v79
    %v86 = vpack.c.b16 %v82, %v81
    %v91 = vadd.bf16 %v51, %v83
    %v92 = vadd.bf16 %v52, %v84
    %v93 = vadd.bf16 %v53, %v85
    %v94 = vadd.bf16 %v54, %v86
    %v95 = vadd.bf16 %v55, %v83
    %v96 = vadd.bf16 %v56, %v84
    %v97 = vadd.bf16 %v57, %v85
    %v98 = vadd.bf16 %v58, %v86
    %v99 = vld [vmem:[%s0] sm:$0xf]
    %v100 = vld [vmem:[%s0 + $0x4] sm:$0xf]
    %vm101 = vcmask 523264
    %v103 = vsel %vm101, %v99, 0
    %105 = vmatprep.subr.bf16.mxu0 0
    %106 = vmatpush1.bf16.msra.mxu0 %v91
    %107 = vmatprep.subr.bf16.mxu0 0
    %108 = vmatpush1.bf16.msra.mxu0 %v92
    %109 = vmatprep.subr.bf16.mxu0 0
    %110 = vmatpush1.bf16.msra.mxu0 %v93
    %111 = vmatprep.subr.bf16.mxu0 0
    %112 = vmatpush1.bf16.msra.mxu0 %v94
    %113 = vmatprep.subr.bf16.mxu0 0
    %114 = vmatpush1.bf16.msra.mxu0 0
    %115 = vmatprep.subr.bf16.mxu0 0
    %116 = vmatpush1.bf16.msra.mxu0 0
    %117 = vmatprep.subr.bf16.mxu0 0
    %118 = vmatpush1.bf16.msra.mxu0 0
    %119 = vmatprep.subr.bf16.mxu0 0
    %120 = vmatpush1.bf16.msra.mxu0 0
    %121 = vmatprep.subr.bf16.mxu0 0
    %122 = vmatpush1.bf16.msra.mxu0 0
    %123 = vmatprep.subr.bf16.mxu0 0
    %124 = vmatpush1.bf16.msra.mxu0 0
    %125 = vmatprep.subr.bf16.mxu0 0
    %126 = vmatpush1.bf16.msra.mxu0 0
    %127 = vmatprep.subr.bf16.mxu0 0
    %128 = vmatpush1.bf16.msra.mxu0 0
    %129 = vmatprep.subr.bf16.mxu0 0
    %130 = vmatpush1.bf16.msra.mxu0 0
    %131 = vmatprep.subr.bf16.mxu0 0
    %132 = vmatpush1.bf16.msra.mxu0 0
    %133 = vmatprep.subr.bf16.mxu0 0
    %134 = vmatpush1.bf16.msra.mxu0 0
    %135 = vmatprep.subr.bf16.mxu0 0
    %136 = vmatpush1.bf16.msra.mxu0 0
    %137 = vmatprep.mubr.bf16.mxu0 0
    %138 = vmatmul.mubr.bf16.gmra.mrb[0].mxu0 %v103
    %v139 = vpop.f32.mrb[0].mxu0
    %v140 = vadd.f32 0.0, %v139
    %v141 = vpop.f32.mrb[0].mxu0
    %v142 = vpop.f32.mrb[0].mxu0
    %v143 = vpop.f32.mrb[0].mxu0
    %144 = vdwg.mxu0
    %v146 = vsel %vm101, %v100, 0
    %148 = vmatprep.subr.bf16.mxu0 0
    %149 = vmatpush1.bf16.msra.mxu0 %v95
    %150 = vmatprep.subr.bf16.mxu0 0
    %151 = vmatpush1.bf16.msra.mxu0 %v96
    %152 = vmatprep.subr.bf16.mxu0 0
    %153 = vmatpush1.bf16.msra.mxu0 %v97
    %154 = vmatprep.subr.bf16.mxu0 0
    %155 = vmatpush1.bf16.msra.mxu0 %v98
    %156 = vmatprep.subr.bf16.mxu0 0
    %157 = vmatpush1.bf16.msra.mxu0 0
    %158 = vmatprep.subr.bf16.mxu0 0
    %159 = vmatpush1.bf16.msra.mxu0 0
    %160 = vmatprep.subr.bf16.mxu0 0
    %161 = vmatpush1.bf16.msra.mxu0 0
    %162 = vmatprep.subr.bf16.mxu0 0
    %163 = vmatpush1.bf16.msra.mxu0 0
    %164 = vmatprep.subr.bf16.mxu0 0
    %165 = vmatpush1.bf16.msra.mxu0 0
    %166 = vmatprep.subr.bf16.mxu0 0
    %167 = vmatpush1.bf16.msra.mxu0 0
    %168 = vmatprep.subr.bf16.mxu0 0
    %169 = vmatpush1.bf16.msra.mxu0 0
    %170 = vmatprep.subr.bf16.mxu0 0
    %171 = vmatpush1.bf16.msra.mxu0 0
    %172 = vmatprep.subr.bf16.mxu0 0
    %173 = vmatpush1.bf16.msra.mxu0 0
    %174 = vmatprep.subr.bf16.mxu0 0
    %175 = vmatpush1.bf16.msra.mxu0 0
    %176 = vmatprep.subr.bf16.mxu0 0
    %177 = vmatpush1.bf16.msra.mxu0 0
    %178 = vmatprep.subr.bf16.mxu0 0
    %179 = vmatpush1.bf16.msra.mxu0 0
    %180 = vmatprep.mubr.bf16.mxu0 0
    %181 = vmatmul.mubr.bf16.gmra.mrb[0].mxu0 %v146
    %v182 = vpop.f32.mrb[0].mxu0
    %v183 = vadd.f32 0.0, %v182
    %v184 = vpop.f32.mrb[0].mxu0
    %v185 = vpop.f32.mrb[0].mxu0
    %v186 = vpop.f32.mrb[0].mxu0
    %187 = vdwg.mxu0
    %v188 = vld [vmem:[%s3] sm:$0x7f]
    %v189 = vld [vmem:[%s3 + $0x8] sm:$0x7f]
    %191 = vset.pattern.permute.xlu0 0
    %192 = vperm.xlu0 %191, %v188
    %v193 = vpop.permute.xlu0 %192
    %196 = vset.pattern.permute.xlu0 0
    %197 = vperm.xlu0 %196, %v189
    %v198 = vpop.permute.xlu0 %197
    %v200 = vmul.f32 %v140, %v193
    %v201 = vmul.f32 %v183, %v198
    %v202 = vld [vmem:[%s4] sm:$0x7f]
    %v203 = vsub.f32 %v200, %v202
    %v204 = vsub.f32 %v201, %v202
    %205 = vst [vmem:[%s5] sm:$0x7f] %v203
    %206 = vst [vmem:[%s5 + $0x8] sm:$0x7f] %v204
    // Predicated region
    $region26: #{tpu_custom_call.1} parent=1 // pred_check
      _
    $region27: #{tpu_custom_call.1} parent=1 // pred_check_branch
      %208 = sbr.rel (0) target = $region29
    $region28: #{tpu_custom_call.1} parent=1 // pred_region
      _
    $region29: #{tpu_custom_call.1} parent=1 // pred_fallthru
      _
    // Predicated region
    $region30: #{tpu_custom_call.1} parent=1 // pred_check
      _
    $region31: #{tpu_custom_call.1} parent=1 // pred_check_branch
      %210 = sbr.rel (0) target = $region33
    $region32: #{tpu_custom_call.1} parent=1 // pred_region
      _
    $region33: #{tpu_custom_call.1} parent=1 // pred_fallthru
      _
    %211 = vsyncpa [#allocation3], 1

</llo_original>
